<compile_context>
chip_gen: v7x
topology: tpu7x:2x2x1
jax: 0.10.0
libtpu: 0.0.40
codegen_flags: <defaults>
</compile_context>

<pallas_src>
import jax
import jax.numpy as jnp
from jax.experimental import pallas as pl
from jax.experimental.pallas import tpu as pltpu


# ----------------------------- hyper-params ---------------------------------
B            = 2            # batch
LATENT       = 8            # hparams['latent_size']
NUM_LATENT   = 1
NUM_CLASSES  = 4
MLP_WIDTH    = 32           # hparams['mlp_width']
MLP_DEPTH    = 3            # hparams['mlp_depth']  -> exactly 1 hidden layer
X_SHAPE      = (1, 8, 8)    # x_shape  -> out dim = 64
CONDITIONAL  = True

Z_DIM    = LATENT * NUM_LATENT                                          # 8
IN_DIM   = Z_DIM + (NUM_CLASSES if CONDITIONAL else 0)                  # 12
OUT_DIM  = X_SHAPE[0] * X_SHAPE[1] * X_SHAPE[2]                         # 64

PAD_W    = 128              # lane-dense padded feature width
ONES_COL = PAD_W - 1        # lane carrying the constant 1.0 (bias trick)

N_HIDDEN = MLP_DEPTH - 2
N_LAYERS = N_HIDDEN + 2     # input + hiddens + (folded output∘out_layer)

SLAB_DTYPE = jnp.bfloat16   # MXU-native weight dtype (v6e / v7x recommendation)

TILE_CAP  = 512             # rows per batch tile (mem-bound utilization ~85% at 512)
SPLIT_MIN = 128             # below this many rows: one exact tile, zero batch padding

# The homogeneous-bias trick needs lane 127 free and all widths <= 128.
assert IN_DIM < ONES_COL and MLP_WIDTH < ONES_COL and OUT_DIM <= PAD_W
assert Z_DIM + NUM_CLASSES < ONES_COL


def _cdiv(a, m):
    return -(-a // m)


def _round_up(n, m):
    return _cdiv(n, m) * m


def _choose_tiling(b):
    """Pick (tile_b, b_pad): minimal padding waste, >=2 (even) tiles for large b
    so the 'parallel' grid axis can shard across v7x's two TensorCores."""
    if b <= SPLIT_MIN:
        return b, b                      # single exact tile (block == full array)
    n_tiles = max(2, _cdiv(b, TILE_CAP))
    if n_tiles % 2:
        n_tiles += 1                     # even tile count -> balanced across 2 TCs
    tile_b = _round_up(_cdiv(b, n_tiles), 8)
    return tile_b, n_tiles * tile_b


# ------------------------------- kernel -------------------------------------
def _make_decoder_kernel(out_w):
    def decoder_kernel(z_ref, c_ref, w_ref, o_ref, x_pad):
        """z_ref: (tile_b, Z_DIM) f32; c_ref: (tile_b, 1) int32;
        w_ref: (N_LAYERS, 128, 128) bf16; o_ref: (tile_b, out_w) f32;
        x_pad: VMEM scratch (tile_b, 128) f32."""
        tb = x_pad.shape[0]

        # Build the 128-lane padded input activation entirely in VMEM:
        #   lanes [0, Z_DIM)                   <- z        (native-width DMA)
        #   lanes [Z_DIM, Z_DIM+NUM_CLASSES)   <- one-hot(c)   (iota == c)
        #   lane  ONES_COL (=127)              <- 1.0      (bias carry)
        #   everything else                    <- 0.0
        x_pad[...] = jnp.zeros_like(x_pad)
        x_pad[:, :Z_DIM] = z_ref[...]
        lane = jax.lax.broadcasted_iota(jnp.int32, (tb, PAD_W), 1)
        cls_lane = c_ref[...] + Z_DIM                     # (tb, 1), broadcasts over lanes
        hot = jnp.where((lane == cls_lane) | (lane == ONES_COL), 1.0, 0.0)
        x = x_pad[...] + hot                              # f32 (tb, 128)

        for i in range(N_LAYERS):                         # static unroll: 3 MXU matmuls
            x = jnp.dot(x.astype(SLAB_DTYPE), w_ref[i],   # bf16 x bf16 -> f32 accumulate
                        preferred_element_type=jnp.float32)
            if i < N_LAYERS - 1:
                x = jnp.maximum(x, 0.0)                   # ReLU on f32 accumulator

        y = jax.nn.sigmoid(x)                             # f32 sigmoid (v5e-safe)
        o_ref[...] = y if out_w == PAD_W else y[:, :out_w]
    return decoder_kernel


# ----------------------------- param prep -----------------------------------
def prepare_params(params, dtype=SLAB_DTYPE):
    """Fold the two final linears (f32) and pack everything into one padded slab."""
    w_in, b_in, w_h, b_h, w_fo, b_fo, w_out, b_out = [
        p.astype(jnp.float32) for p in params]
    w_last = w_fo @ w_out                 # (32, 64)   folded weight
    b_last = b_fo @ w_out + b_out         # (1, 64)    folded bias
    layers = [(w_in, b_in), (w_h, b_h), (w_last, b_last)]
    assert len(layers) == N_LAYERS

    slab = jnp.zeros((N_LAYERS, PAD_W, PAD_W), jnp.float32)
    for i, (w, b) in enumerate(layers):
        fi, fo = w.shape
        slab = slab.at[i, :fi, :fo].set(w)
        slab = slab.at[i, ONES_COL, :fo].set(b.reshape(-1))     # bias row
        if i < N_LAYERS - 1:
            slab = slab.at[i, ONES_COL, ONES_COL].set(1.0)      # carry the 1.0 (exact in bf16)
    return slab.astype(dtype)


# ------------------------------- wrapper -------------------------------------
def decoder_forward(z, w_slab, c=None):
    """z: (B, latent) float; c: (B,) int class indices (required when CONDITIONAL)."""
    b = z.shape[0]
    z = z.astype(jnp.float32).reshape(b, Z_DIM)
    assert CONDITIONAL and c is not None
    c = jnp.asarray(c).reshape(b, 1).astype(jnp.int32)

    tile_b, b_pad = _choose_tiling(b)
    if b_pad != b:
        z = jnp.pad(z, ((0, b_pad - b), (0, 0)))
        c = jnp.pad(c, ((0, b_pad - b), (0, 0)))

    # Full unmasked 128-lane store for small batches; trim to the 64 real output
    # lanes once the kernel is output-bandwidth bound (large B).
    out_w = PAD_W if b <= SPLIT_MIN else OUT_DIM

    out = pl.pallas_call(
        _make_decoder_kernel(out_w),
        out_shape=jax.ShapeDtypeStruct((b_pad, out_w), jnp.float32),
        grid=(b_pad // tile_b,),
        in_specs=[
            pl.BlockSpec((tile_b, Z_DIM), lambda i: (i, 0)),    # 48 B/row (vs 512 padded)
            pl.BlockSpec((tile_b, 1), lambda i: (i, 0)),        # class id column
            # constant index_map -> one DMA, VMEM-resident; single buffer (never re-fetched)
            pl.BlockSpec((N_LAYERS, PAD_W, PAD_W), lambda i: (0, 0, 0),
                         pipeline_mode=pl.Buffered(buffer_count=1)),
        ],
        out_specs=pl.BlockSpec((tile_b, out_w), lambda i: (i, 0)),
        scratch_shapes=[pltpu.VMEM((tile_b, PAD_W), jnp.float32)],
        compiler_params=pltpu.CompilerParams(
            dimension_semantics=("parallel",),    # shard batch tiles across v7x's 2 TCs
        ),
    )(z, c, w_slab)
    return out[:b, :OUT_DIM]


# ------------------------- deterministic parameters ---------------------------
def init_params(key):
    ks = jax.random.split(key, 8)

    def linear(kw, kb, fan_in, fan_out):
        # PyTorch nn.Linear default init: U(-1/sqrt(fan_in), 1/sqrt(fan_in))
        bound = 1.0 / jnp.sqrt(fan_in)
        w = jax.random.uniform(kw, (fan_in, fan_out), jnp.float32, -bound, bound)
        b = jax.random.uniform(kb, (1, fan_out), jnp.float32, -bound, bound)
        return w, b

    w_in,  b_in  = linear(ks[0], ks[1], IN_DIM,    MLP_WIDTH)   # MLP.input
    w_h,   b_h   = linear(ks[2], ks[3], MLP_WIDTH, MLP_WIDTH)   # MLP.hiddens[0]
    w_fo,  b_fo  = linear(ks[4], ks[5], MLP_WIDTH, MLP_WIDTH)   # MLP.output
    w_out, b_out = linear(ks[6], ks[7], MLP_WIDTH, OUT_DIM)     # Decoder.out_layer
    return (w_in, b_in, w_h, b_h, w_fo, b_fo, w_out, b_out)


def decoder_reference(z, params, c=None):
    """Pure-JAX f32 reference matching the PyTorch module (eval mode)."""
    w_in, b_in, w_h, b_h, w_fo, b_fo, w_out, b_out = params
    z = z.astype(jnp.float32)
    if CONDITIONAL:
        onehot = jax.nn.one_hot(c, NUM_CLASSES, dtype=jnp.float32)
        z = jnp.concatenate([z, onehot], axis=-1)
    x = jax.nn.relu(z @ w_in + b_in)
    x = jax.nn.relu(x @ w_h + b_h)
    x = x @ w_fo + b_fo
    x = x @ w_out + b_out
    return jax.nn.sigmoid(x)


if __name__ == "__main__":
    key = jax.random.PRNGKey(0)
    k_p, k_z, k_c = jax.random.split(key, 3)

    params = init_params(k_p)
    w_slab = prepare_params(params)                       # bf16 packed slab

    z = jax.random.normal(k_z, (B, Z_DIM), jnp.float32)
    c = jax.random.randint(k_c, (B,), 0, NUM_CLASSES, jnp.int32)

    fwd = jax.jit(decoder_forward)
    out = jax.block_until_ready(fwd(z, w_slab, c))

    assert out.shape == (B, OUT_DIM)
    assert bool(jnp.all((out >= 0.0) & (out <= 1.0)))

    ref = decoder_reference(z, params, c)
    max_err = float(jnp.max(jnp.abs(out - ref)))
    # bf16 MXU weights (per perf review) -> tolerance relaxed vs the f32 reference;
    # sigmoid/ReLU run on the f32 accumulator, so errors stay at the bf16-rounding level.
    assert bool(jnp.allclose(out, ref, atol=3e-2, rtol=3e-2)), max_err

    print("KERNEL_OK")
</pallas_src>

<mosaic_0001>
module attributes {stable_mosaic.version = 11 : i64} {
  func.func @decoder_kernel(%arg0: i32, %arg1: memref<2x8xf32, #tpu.memory_space<vmem>>, %arg2: memref<2x1xi32, #tpu.memory_space<vmem>>, %arg3: memref<3x128x128xbf16, #tpu.memory_space<vmem>>, %arg4: memref<2x128xf32, #tpu.memory_space<vmem>>, %arg5: memref<2x128xf32, #tpu.memory_space<vmem>>) attributes {dimension_semantics = [#tpu.dimension_semantics<parallel>], iteration_bounds = array<i64: 1>, scalar_prefetch = 0 : i64, scratch_operands = 1 : i64, tpu.core_type = #tpu.core_type<tc>, window_params = [{transform_indices = @transform_0, window_bounds = array<i64: 2, 8>}, {transform_indices = @transform_1, window_bounds = array<i64: 2, 1>}, {pipeline_mode = #tpu.pipeline_mode<synchronous>, transform_indices = @transform_2, window_bounds = array<i64: 3, 128, 128>}, {transform_indices = @transform_3, window_bounds = array<i64: 2, 128>}]} {
    %cst = arith.constant 0.000000e+00 : f32
    %0 = vector.broadcast %cst : f32 to vector<2x128xf32>
    %c0 = arith.constant 0 : index
    %c0_0 = arith.constant 0 : index
    %1 = vector.load %arg5[%c0, %c0_0] : memref<2x128xf32, #tpu.memory_space<vmem>>, vector<2x128xf32>
    tpu.vector_store %arg5[%c0, %c0_0], %0 {strides = array<i32>} : memref<2x128xf32, #tpu.memory_space<vmem>>, vector<2x128xf32>,
    %c0_1 = arith.constant 0 : index
    %c0_2 = arith.constant 0 : index
    %2 = vector.load %arg1[%c0_1, %c0_2] : memref<2x8xf32, #tpu.memory_space<vmem>>, vector<2x8xf32>
    %c0_3 = arith.constant 0 : index
    %c0_4 = arith.constant 0 : index
    %3 = vector.load %arg5[%c0_3, %c0_4] : memref<2x128xf32, #tpu.memory_space<vmem>>, vector<2x8xf32>
    tpu.vector_store %arg5[%c0_3, %c0_4], %2 {strides = array<i32>} : memref<2x128xf32, #tpu.memory_space<vmem>>, vector<2x8xf32>,
    %4 = tpu.iota {dimensions = array<i32: 1>} : vector<2x128xi32>
    %c0_5 = arith.constant 0 : index
    %c0_6 = arith.constant 0 : index
    %5 = vector.load %arg2[%c0_5, %c0_6] : memref<2x1xi32, #tpu.memory_space<vmem>>, vector<2x1xi32>
    %c8_i32 = arith.constant 8 : i32
    %6 = vector.broadcast %c8_i32 : i32 to vector<2x1xi32>
    %7 = arith.addi %5, %6 : vector<2x1xi32>
    %8 = vector.broadcast %7 : vector<2x1xi32> to vector<2x128xi32>
    %9 = arith.cmpi eq, %4, %8 : vector<2x128xi32>
    %c127_i32 = arith.constant 127 : i32
    %10 = vector.broadcast %c127_i32 : i32 to vector<2x128xi32>
    %11 = arith.cmpi eq, %4, %10 : vector<2x128xi32>
    %12 = arith.ori %9, %11 : vector<2x128xi1>
    %cst_7 = arith.constant 1.000000e+00 : f32
    %cst_8 = arith.constant 0.000000e+00 : f32
    %13 = vector.broadcast %cst_7 : f32 to vector<2x128xf32>
    %14 = vector.broadcast %cst_8 : f32 to vector<2x128xf32>
    %15 = arith.select %12, %13, %14 : vector<2x128xi1>, vector<2x128xf32>
    %c0_9 = arith.constant 0 : index
    %c0_10 = arith.constant 0 : index
    %16 = vector.load %arg5[%c0_9, %c0_10] : memref<2x128xf32, #tpu.memory_space<vmem>>, vector<2x128xf32>
    %17 = arith.addf %16, %15 : vector<2x128xf32>
    %18 = arith.truncf %17 : vector<2x128xf32> to vector<2x128xbf16>
    %c0_11 = arith.constant 0 : index
    %c0_12 = arith.constant 0 : index
    %c0_13 = arith.constant 0 : index
    %19 = vector.load %arg3[%c0_11, %c0_12, %c0_13] : memref<3x128x128xbf16, #tpu.memory_space<vmem>>, vector<1x128x128xbf16>
    %20 = vector.shape_cast %19 : vector<1x128x128xbf16> to vector<128x128xbf16>
    %cst_14 = arith.constant dense<0.000000e+00> : vector<2x128xf32>
    %21 = tpu.matmul %18, %20, %cst_14 {dimension_numbers = #tpu.dot_dimension_numbers<[1], [0], [0], [1], [0, 0, 1, 1], [], []>} : vector<2x128xbf16>, vector<128x128xbf16>, vector<2x128xf32> -> vector<2x128xf32>
    %cst_15 = arith.constant 0.000000e+00 : f32
    %22 = vector.broadcast %cst_15 : f32 to vector<2x128xf32>
    %23 = arith.maximumf %21, %22 : vector<2x128xf32>
    %24 = arith.truncf %23 : vector<2x128xf32> to vector<2x128xbf16>
    %c1 = arith.constant 1 : index
    %c0_16 = arith.constant 0 : index
    %c0_17 = arith.constant 0 : index
    %25 = vector.load %arg3[%c1, %c0_16, %c0_17] : memref<3x128x128xbf16, #tpu.memory_space<vmem>>, vector<1x128x128xbf16>
    %26 = vector.shape_cast %25 : vector<1x128x128xbf16> to vector<128x128xbf16>
    %cst_18 = arith.constant dense<0.000000e+00> : vector<2x128xf32>
    %27 = tpu.matmul %24, %26, %cst_18 {dimension_numbers = #tpu.dot_dimension_numbers<[1], [0], [0], [1], [0, 0, 1, 1], [], []>} : vector<2x128xbf16>, vector<128x128xbf16>, vector<2x128xf32> -> vector<2x128xf32>
    %cst_19 = arith.constant 0.000000e+00 : f32
    %28 = vector.broadcast %cst_19 : f32 to vector<2x128xf32>
    %29 = arith.maximumf %27, %28 : vector<2x128xf32>
    %30 = arith.truncf %29 : vector<2x128xf32> to vector<2x128xbf16>
    %c2 = arith.constant 2 : index
    %c0_20 = arith.constant 0 : index
    %c0_21 = arith.constant 0 : index
    %31 = vector.load %arg3[%c2, %c0_20, %c0_21] : memref<3x128x128xbf16, #tpu.memory_space<vmem>>, vector<1x128x128xbf16>
    %32 = vector.shape_cast %31 : vector<1x128x128xbf16> to vector<128x128xbf16>
    %cst_22 = arith.constant dense<0.000000e+00> : vector<2x128xf32>
    %33 = tpu.matmul %30, %32, %cst_22 {dimension_numbers = #tpu.dot_dimension_numbers<[1], [0], [0], [1], [0, 0, 1, 1], [], []>} : vector<2x128xbf16>, vector<128x128xbf16>, vector<2x128xf32> -> vector<2x128xf32>
    %34 = arith.negf %33 : vector<2x128xf32>
    %35 = math.exp %34 : vector<2x128xf32>
    %cst_23 = arith.constant 1.000000e+00 : f32
    %36 = vector.broadcast %cst_23 : f32 to vector<2x128xf32>
    %37 = arith.addf %36, %35 : vector<2x128xf32>
    %38 = arith.divf %36, %37 : vector<2x128xf32>
    %c0_24 = arith.constant 0 : index
    %c0_25 = arith.constant 0 : index
    %39 = vector.load %arg4[%c0_24, %c0_25] : memref<2x128xf32, #tpu.memory_space<vmem>>, vector<2x128xf32>
    tpu.vector_store %arg4[%c0_24, %c0_25], %38 {strides = array<i32>} : memref<2x128xf32, #tpu.memory_space<vmem>>, vector<2x128xf32>,
    return
  }
  func.func @transform_0(%arg0: i32) -> (i32, i32) {
    %c0_i32 = arith.constant 0 : i32
    %c0_i32_0 = arith.constant 0 : i32
    return %arg0, %c0_i32 : i32, i32
  }
  func.func @transform_1(%arg0: i32) -> (i32, i32) {
    %c0_i32 = arith.constant 0 : i32
    %c0_i32_0 = arith.constant 0 : i32
    return %arg0, %c0_i32 : i32, i32
  }
  func.func @transform_2(%arg0: i32) -> (i32, i32, i32) {
    %c0_i32 = arith.constant 0 : i32
    %c0_i32_0 = arith.constant 0 : i32
    %c0_i32_1 = arith.constant 0 : i32
    %c0_i32_2 = arith.constant 0 : i32
    return %c0_i32, %c0_i32_0, %c0_i32_1 : i32, i32, i32
  }
  func.func @transform_3(%arg0: i32) -> (i32, i32) {
    %c0_i32 = arith.constant 0 : i32
    %c0_i32_0 = arith.constant 0 : i32
    return %arg0, %c0_i32 : i32, i32
  }
}

</mosaic_0001>

<llo_original>
// kernel: decoder_forward.1
$region0: #{decoder_forward.1}
  #allocation0 [shape = 'u32[]', space=smem, size = 0x4, offset = 0x4, fixed_abs, tag = 'smem constant byte address 0x4 - core index']
  #allocation1 [shape = 'u32[144,128]{1,0:T(1,128)}', space=vmem, size = 0x12000, scoped, tag = 'internal scratch']
  #allocation2 [shape = 'f32[2,128]{1,0:T(2,128)}', space=vmem, size = 0x400, scoped, tag = 'scratch operand']
  %s0 = inlined_call_operand.vmem [shape: f32[2,8], index: 0, kind: input, shape index: {}]
  %s1 = inlined_call_operand.vmem [shape: s32[2,1], index: 1, kind: input, shape index: {}]
  %s2 = inlined_call_operand.hbm [shape: bf16[3,128,128], index: 2, kind: input, shape index: {}]
  %s3 = inlined_call_operand.hbm [shape: f32[2,128], index: 3, kind: output, shape index: {}]
  %s4 = sld [smem:[#allocation0]]
  $region26: #{decoder_forward.1} parent=0
    _
  %s6 = ssub.s32 1, %s4
  %s7 = scalar_select 0, %s6, %s4
  $region1: #{decoder_forward.1} parent=0
    #allocation3 [shape = 'u8[98304]{0}', space=vmem, size = 0x18000, scoped, tag = 'input window, operand 2, single buffered']
    #allocation4 [shape = 's32[1]{0}', space=sflag, size = 0x4, scoped, tag = 'scoped memory for decoder_forward.1']
    #allocation5 [shape = 's32[1]{0}', space=sflag, size = 0x4, scoped, tag = 'scoped memory for decoder_forward.1']
    #allocation6 [shape = 'u8[1024]{0}', space=vmem, size = 0x400, scoped, tag = 'output window, operand 0, single buffered']
    %8 = vsyncpa [#allocation4], 0
    %9 = vsyncpa [#allocation5], 0
    // Predicated region
    $region2: #{decoder_forward.1} parent=1 // pred_check
      _
    $region3: #{decoder_forward.1} parent=1 // pred_check_branch
      %11 = sbr.rel (0) target = $region5
    $region4: #{decoder_forward.1} parent=1 // pred_region
      _
    $region5: #{decoder_forward.1} parent=1 // pred_fallthru
      _
    // Predicated region
    $region6: #{decoder_forward.1} parent=1 // pred_check
      _
    $region7: #{decoder_forward.1} parent=1 // pred_check_branch
      %13 = sbr.rel (0) target = $region9
    $region8: #{decoder_forward.1} parent=1 // pred_region
      _
    $region9: #{decoder_forward.1} parent=1 // pred_fallthru
      _
    // Predicated region
    $region10: #{decoder_forward.1} parent=1 // pred_check
      _
    $region11: #{decoder_forward.1} parent=1 // pred_check_branch
      %15 = sbr.rel (0) target = $region13
    $region12: #{decoder_forward.1} parent=1 // pred_region
      %s17 = ssub.s32 3072, 3072
      %18 = vsyncadd [#allocation4], %s17
      %s19 = sshll.u32 [#allocation3], 4
      %s20 = int_to_ptr.vmem [resolvable:$true] %s19
      %25 = dma.hbm_to_vmem [thread:$0]  %s2, 3072, %s20, [#allocation4], 64, 64, 4
    $region13: #{decoder_forward.1} parent=1 // pred_fallthru
      _
    // Predicated region
    $region14: #{decoder_forward.1} parent=1 // pred_check
      _
    $region15: #{decoder_forward.1} parent=1 // pred_check_branch
      %27 = sbr.rel (0) target = $region17
    $region16: #{decoder_forward.1} parent=1 // pred_region
      %28 = dma.done [#allocation4], 3072
    $region17: #{decoder_forward.1} parent=1 // pred_fallthru
      _
    %30 = vst [vmem:[#allocation2] sm:$0x3] 0.0
    %v31 = vld [vmem:[%s0] sm:$0x3]
    %vm32 = vcmask 58368
    %33 = vst.msk [vmem:[#allocation2] sm:$0x3] %vm32, %v31
    %v34 = vlaneseq
    %v35 = vand.u32 %v34, 127
    %v36 = vld [vmem:[%s1] sm:$0x3]
    %v37 = vadd.s32 %v36, 8
    %38 = vset.pattern.permute.xlu0 0
    %39 = vperm.xlu0 %38, %v37
    %v40 = vpop.permute.xlu0 %39
    %vm41 = vcmp.eq.s32.totalorder %v35, %v40
    %vm42 = vcmp.eq.s32.totalorder %v35, 127
    %vm43 = vmor %vm41, %vm42
    %v44 = vsel %vm43, 1.0, 0.0
    %v45 = vld [vmem:[#allocation2] sm:$0x3]
    %v46 = vadd.f32 %v45, %v44
    %v47 = vpack.c.bf16 %v46, %v46
    %v48 = vld [vmem:[#allocation3] sm:$0xf]
    %v49 = vld [vmem:[#allocation3 + $0x4] sm:$0xf]
    %v50 = vld [vmem:[#allocation3 + $0x8] sm:$0xf]
    %v51 = vld [vmem:[#allocation3 + $0xc] sm:$0xf]
    %v52 = vld [vmem:[#allocation3 + $0x10] sm:$0xf]
    %v53 = vld [vmem:[#allocation3 + $0x14] sm:$0xf]
    %v54 = vld [vmem:[#allocation3 + $0x18] sm:$0xf]
    %v55 = vld [vmem:[#allocation3 + $0x1c] sm:$0xf]
    %v56 = vld [vmem:[#allocation3 + $0x20] sm:$0xf]
    %v57 = vld [vmem:[#allocation3 + $0x24] sm:$0xf]
    %v58 = vld [vmem:[#allocation3 + $0x28] sm:$0xf]
    %v59 = vld [vmem:[#allocation3 + $0x2c] sm:$0xf]
    %v60 = vld [vmem:[#allocation3 + $0x30] sm:$0xf]
    %v61 = vld [vmem:[#allocation3 + $0x34] sm:$0xf]
    %v62 = vld [vmem:[#allocation3 + $0x38] sm:$0xf]
    %v63 = vld [vmem:[#allocation3 + $0x3c] sm:$0xf]
    %v80 = vunpack.c.l.b16 %v48
    %v81 = vunpack.c.l.b16 %v49
    %v82 = vunpack.c.l.b16 %v50
    %v83 = vunpack.c.l.b16 %v51
    %v84 = vunpack.c.l.b16 %v52
    %v85 = vunpack.c.l.b16 %v53
    %v86 = vunpack.c.l.b16 %v54
    %v87 = vunpack.c.l.b16 %v55
    %v88 = vunpack.c.l.b16 %v56
    %v89 = vunpack.c.l.b16 %v57
    %v90 = vunpack.c.l.b16 %v58
    %v91 = vunpack.c.l.b16 %v59
    %v92 = vunpack.c.l.b16 %v60
    %v93 = vunpack.c.l.b16 %v61
    %v94 = vunpack.c.l.b16 %v62
    %v95 = vunpack.c.l.b16 %v63
    %v96 = vpack.c.b16 %v81, %v80
    %v97 = vpack.c.b16 %v83, %v82
    %v98 = vpack.c.b16 %v85, %v84
    %v99 = vpack.c.b16 %v87, %v86
    %v100 = vpack.c.b16 %v89, %v88
    %v101 = vpack.c.b16 %v91, %v90
    %v102 = vpack.c.b16 %v93, %v92
    %v103 = vpack.c.b16 %v95, %v94
    %112 = vmatprep.subr.bf16.mxu0 0
    %113 = vmatpush1.bf16.msra.mxu0 %v96
    %114 = vmatprep.subr.bf16.mxu0 0
    %115 = vmatpush1.bf16.msra.mxu0 %v97
    %116 = vmatprep.subr.bf16.mxu0 0
    %117 = vmatpush1.bf16.msra.mxu0 %v98
    %118 = vmatprep.subr.bf16.mxu0 0
    %119 = vmatpush1.bf16.msra.mxu0 %v99
    %120 = vmatprep.subr.bf16.mxu0 0
    %121 = vmatpush1.bf16.msra.mxu0 %v100
    %122 = vmatprep.subr.bf16.mxu0 0
    %123 = vmatpush1.bf16.msra.mxu0 %v101
    %124 = vmatprep.subr.bf16.mxu0 0
    %125 = vmatpush1.bf16.msra.mxu0 %v102
    %126 = vmatprep.subr.bf16.mxu0 0
    %127 = vmatpush1.bf16.msra.mxu0 %v103
    %128 = vmatprep.subr.bf16.mxu0 0
    %129 = vmatpush1.bf16.msra.mxu0 0
    %130 = vmatprep.subr.bf16.mxu0 0
    %131 = vmatpush1.bf16.msra.mxu0 0
    %132 = vmatprep.subr.bf16.mxu0 0
    %133 = vmatpush1.bf16.msra.mxu0 0
    %134 = vmatprep.subr.bf16.mxu0 0
    %135 = vmatpush1.bf16.msra.mxu0 0
    %136 = vmatprep.subr.bf16.mxu0 0
    %137 = vmatpush1.bf16.msra.mxu0 0
    %138 = vmatprep.subr.bf16.mxu0 0
    %139 = vmatpush1.bf16.msra.mxu0 0
    %140 = vmatprep.subr.bf16.mxu0 0
    %141 = vmatpush1.bf16.msra.mxu0 0
    %142 = vmatprep.subr.bf16.mxu0 0
    %143 = vmatpush1.bf16.msra.mxu0 0
    %144 = vmatprep.mubr.bf16.mxu0 0
    %145 = vmatmul.mubr.bf16.gmra.mrb[0].mxu0 %v47
    %v146 = vpop.f32.mrb[0].mxu0
    %v147 = vadd.f32 0.0, %v146
    %v148 = vpop.f32.mrb[0].mxu0
    %v149 = vpop.f32.mrb[0].mxu0
    %v150 = vpop.f32.mrb[0].mxu0
    %151 = vdwg.mxu0
    %v152 = vmax.f32 %v147, 0.0
    %v153 = vpack.c.bf16 %v152, %v152
    %s154 = scalar_lea.vmem [#allocation3], 64
    %v155 = vld [vmem:[%s154] sm:$0xf]
    %v156 = vld [vmem:[%s154 + $0x4] sm:$0xf]
    %v157 = vld [vmem:[%s154 + $0x8] sm:$0xf]
    %v158 = vld [vmem:[%s154 + $0xc] sm:$0xf]
    %v159 = vld [vmem:[%s154 + $0x10] sm:$0xf]
    %v160 = vld [vmem:[%s154 + $0x14] sm:$0xf]
    %v161 = vld [vmem:[%s154 + $0x18] sm:$0xf]
    %v162 = vld [vmem:[%s154 + $0x1c] sm:$0xf]
    %v163 = vld [vmem:[%s154 + $0x20] sm:$0xf]
    %v164 = vld [vmem:[%s154 + $0x24] sm:$0xf]
    %v165 = vld [vmem:[%s154 + $0x28] sm:$0xf]
    %v166 = vld [vmem:[%s154 + $0x2c] sm:$0xf]
    %v167 = vld [vmem:[%s154 + $0x30] sm:$0xf]
    %v168 = vld [vmem:[%s154 + $0x34] sm:$0xf]
    %v169 = vld [vmem:[%s154 + $0x38] sm:$0xf]
    %v170 = vld [vmem:[%s154 + $0x3c] sm:$0xf]
    %v187 = vunpack.c.l.b16 %v155
    %v188 = vunpack.c.l.b16 %v156
    %v189 = vunpack.c.l.b16 %v157
    %v190 = vunpack.c.l.b16 %v158
    %v191 = vunpack.c.l.b16 %v159
    %v192 = vunpack.c.l.b16 %v160
    %v193 = vunpack.c.l.b16 %v161
    %v194 = vunpack.c.l.b16 %v162
    %v195 = vunpack.c.l.b16 %v163
    %v196 = vunpack.c.l.b16 %v164
    %v197 = vunpack.c.l.b16 %v165
    %v198 = vunpack.c.l.b16 %v166
    %v199 = vunpack.c.l.b16 %v167
    %v200 = vunpack.c.l.b16 %v168
    %v201 = vunpack.c.l.b16 %v169
    %v202 = vunpack.c.l.b16 %v170
    %v203 = vpack.c.b16 %v188, %v187
    %v204 = vpack.c.b16 %v190, %v189
    %v205 = vpack.c.b16 %v192, %v191
    %v206 = vpack.c.b16 %v194, %v193
    %v207 = vpack.c.b16 %v196, %v195
    %v208 = vpack.c.b16 %v198, %v197
    %v209 = vpack.c.b16 %v200, %v199
    %v210 = vpack.c.b16 %v202, %v201
    %219 = vmatprep.subr.bf16.mxu0 0
    %220 = vmatpush1.bf16.msra.mxu0 %v203
    %221 = vmatprep.subr.bf16.mxu0 0
    %222 = vmatpush1.bf16.msra.mxu0 %v204
    %223 = vmatprep.subr.bf16.mxu0 0
    %224 = vmatpush1.bf16.msra.mxu0 %v205
    %225 = vmatprep.subr.bf16.mxu0 0
    %226 = vmatpush1.bf16.msra.mxu0 %v206
    %227 = vmatprep.subr.bf16.mxu0 0
    %228 = vmatpush1.bf16.msra.mxu0 %v207
    %229 = vmatprep.subr.bf16.mxu0 0
    %230 = vmatpush1.bf16.msra.mxu0 %v208
    %231 = vmatprep.subr.bf16.mxu0 0
    %232 = vmatpush1.bf16.msra.mxu0 %v209
    %233 = vmatprep.subr.bf16.mxu0 0
    %234 = vmatpush1.bf16.msra.mxu0 %v210
    %235 = vmatprep.subr.bf16.mxu0 0
    %236 = vmatpush1.bf16.msra.mxu0 0
    %237 = vmatprep.subr.bf16.mxu0 0
    %238 = vmatpush1.bf16.msra.mxu0 0
    %239 = vmatprep.subr.bf16.mxu0 0
    %240 = vmatpush1.bf16.msra.mxu0 0
    %241 = vmatprep.subr.bf16.mxu0 0
    %242 = vmatpush1.bf16.msra.mxu0 0
    %243 = vmatprep.subr.bf16.mxu0 0
    %244 = vmatpush1.bf16.msra.mxu0 0
    %245 = vmatprep.subr.bf16.mxu0 0
    %246 = vmatpush1.bf16.msra.mxu0 0
    %247 = vmatprep.subr.bf16.mxu0 0
    %248 = vmatpush1.bf16.msra.mxu0 0
    %249 = vmatprep.subr.bf16.mxu0 0
    %250 = vmatpush1.bf16.msra.mxu0 0
    %251 = vmatprep.mubr.bf16.mxu0 0
    %252 = vmatmul.mubr.bf16.gmra.mrb[0].mxu0 %v153
    %v253 = vpop.f32.mrb[0].mxu0
    %v254 = vadd.f32 0.0, %v253
    %v255 = vpop.f32.mrb[0].mxu0
    %v256 = vpop.f32.mrb[0].mxu0
    %v257 = vpop.f32.mrb[0].mxu0
    %258 = vdwg.mxu0
    %v259 = vmax.f32 %v254, 0.0
    %v260 = vpack.c.bf16 %v259, %v259
    %s261 = scalar_lea.vmem [#allocation3], 128
    %v262 = vld [vmem:[%s261] sm:$0xf]
    %v263 = vld [vmem:[%s261 + $0x4] sm:$0xf]
    %v264 = vld [vmem:[%s261 + $0x8] sm:$0xf]
    %v265 = vld [vmem:[%s261 + $0xc] sm:$0xf]
    %v266 = vld [vmem:[%s261 + $0x10] sm:$0xf]
    %v267 = vld [vmem:[%s261 + $0x14] sm:$0xf]
    %v268 = vld [vmem:[%s261 + $0x18] sm:$0xf]
    %v269 = vld [vmem:[%s261 + $0x1c] sm:$0xf]
    %v270 = vld [vmem:[%s261 + $0x20] sm:$0xf]
    %v271 = vld [vmem:[%s261 + $0x24] sm:$0xf]
    %v272 = vld [vmem:[%s261 + $0x28] sm:$0xf]
    %v273 = vld [vmem:[%s261 + $0x2c] sm:$0xf]
    %v274 = vld [vmem:[%s261 + $0x30] sm:$0xf]
    %v275 = vld [vmem:[%s261 + $0x34] sm:$0xf]
    %v276 = vld [vmem:[%s261 + $0x38] sm:$0xf]
    %v277 = vld [vmem:[%s261 + $0x3c] sm:$0xf]
    %v294 = vunpack.c.l.b16 %v262
    %v295 = vunpack.c.l.b16 %v263
    %v296 = vunpack.c.l.b16 %v264
    %v297 = vunpack.c.l.b16 %v265
    %v298 = vunpack.c.l.b16 %v266
    %v299 = vunpack.c.l.b16 %v267
    %v300 = vunpack.c.l.b16 %v268
    %v301 = vunpack.c.l.b16 %v269
    %v302 = vunpack.c.l.b16 %v270
    %v303 = vunpack.c.l.b16 %v271
    %v304 = vunpack.c.l.b16 %v272
    %v305 = vunpack.c.l.b16 %v273
    %v306 = vunpack.c.l.b16 %v274
    %v307 = vunpack.c.l.b16 %v275
    %v308 = vunpack.c.l.b16 %v276
    %v309 = vunpack.c.l.b16 %v277
    %v310 = vpack.c.b16 %v295, %v294
    %v311 = vpack.c.b16 %v297, %v296
    %v312 = vpack.c.b16 %v299, %v298
    %v313 = vpack.c.b16 %v301, %v300
    %v314 = vpack.c.b16 %v303, %v302
    %v315 = vpack.c.b16 %v305, %v304
    %v316 = vpack.c.b16 %v307, %v306
    %v317 = vpack.c.b16 %v309, %v308
    %326 = vmatprep.subr.bf16.mxu0 0
    %327 = vmatpush1.bf16.msra.mxu0 %v310
    %328 = vmatprep.subr.bf16.mxu0 0
    %329 = vmatpush1.bf16.msra.mxu0 %v311
    %330 = vmatprep.subr.bf16.mxu0 0
    %331 = vmatpush1.bf16.msra.mxu0 %v312
    %332 = vmatprep.subr.bf16.mxu0 0
    %333 = vmatpush1.bf16.msra.mxu0 %v313
    %334 = vmatprep.subr.bf16.mxu0 0
    %335 = vmatpush1.bf16.msra.mxu0 %v314
    %336 = vmatprep.subr.bf16.mxu0 0
    %337 = vmatpush1.bf16.msra.mxu0 %v315
    %338 = vmatprep.subr.bf16.mxu0 0
    %339 = vmatpush1.bf16.msra.mxu0 %v316
    %340 = vmatprep.subr.bf16.mxu0 0
    %341 = vmatpush1.bf16.msra.mxu0 %v317
    %342 = vmatprep.subr.bf16.mxu0 0
    %343 = vmatpush1.bf16.msra.mxu0 0
    %344 = vmatprep.subr.bf16.mxu0 0
    %345 = vmatpush1.bf16.msra.mxu0 0
    %346 = vmatprep.subr.bf16.mxu0 0
    %347 = vmatpush1.bf16.msra.mxu0 0
    %348 = vmatprep.subr.bf16.mxu0 0
    %349 = vmatpush1.bf16.msra.mxu0 0
    %350 = vmatprep.subr.bf16.mxu0 0
    %351 = vmatpush1.bf16.msra.mxu0 0
    %352 = vmatprep.subr.bf16.mxu0 0
    %353 = vmatpush1.bf16.msra.mxu0 0
    %354 = vmatprep.subr.bf16.mxu0 0
    %355 = vmatpush1.bf16.msra.mxu0 0
    %356 = vmatprep.subr.bf16.mxu0 0
    %357 = vmatpush1.bf16.msra.mxu0 0
    %358 = vmatprep.mubr.bf16.mxu0 0
    %359 = vmatmul.mubr.bf16.gmra.mrb[0].mxu0 %v260
    %v360 = vpop.f32.mrb[0].mxu0
    %v361 = vadd.f32 0.0, %v360
    %v362 = vpop.f32.mrb[0].mxu0
    %v363 = vpop.f32.mrb[0].mxu0
    %v364 = vpop.f32.mrb[0].mxu0
    %365 = vdwg.mxu0
    %v366 = vxor.u32 %v361, 2147483648
    %v367 = vmul.f32 %v366, 1.442695
    %v368 = vpow.pop %v367
    %v369 = vadd.f32 %v368, 1.0
    %v370 = vrcp.pop %v369
    %v371 = vmul.f32 1.0, %v370
    %372 = vst [vmem:[#allocation6] sm:$0x3] %v371
    // Predicated region
    $region18: #{decoder_forward.1} parent=1 // pred_check
      _
    $region19: #{decoder_forward.1} parent=1 // pred_check_branch
      %374 = sbr.rel (0) target = $region21
    $region20: #{decoder_forward.1} parent=1 // pred_region
      %s376 = ssub.s32 32, 32
      %377 = vsyncadd [#allocation5], %s376
      %s379 = sshll.u32 [#allocation6], 4
      %s380 = int_to_ptr.vmem [resolvable:$true] %s379
      %382 = dma.vmem_to_hbm [thread:$0]  %s380, 32, %s3, [#allocation5]
    $region21: #{decoder_forward.1} parent=1 // pred_fallthru
      _
    // Predicated region
    $region22: #{decoder_forward.1} parent=1 // pred_check
      _
    $region23: #{decoder_forward.1} parent=1 // pred_check_branch
      %384 = sbr.rel (0) target = $region25
    $region24: #{decoder_forward.1} parent=1 // pred_region
      %385 = dma.done [#allocation5], 32
    $region25: #{decoder_forward.1} parent=1 // pred_fallthru
      _
    %386 = vsyncpa [#allocation4], 1
    %387 = vsyncpa [#allocation5], 1

</llo_original>
